<compile_context>
chip_gen: v7x
topology: tpu7x:2x2x1
jax: 0.10.0
libtpu: 0.0.40
codegen_flags: <defaults>
</compile_context>

<pallas_src>
import functools
import math

import jax
import jax.numpy as jnp
from jax.experimental import pallas as pl
from jax.experimental.pallas import tpu as pltpu


def _round_up(x, m):
    return ((x + m - 1) // m) * m


# ---------------------------------------------------------------------------
# Fused Pallas kernel: all conv layers of the head for one batch element
# ---------------------------------------------------------------------------
def _cls_head_fused_kernel(xp_ref, m_ref, *refs, num_hidden, pad):
    """Fused ClsHead forward for one batch element (whole time extent).

    xp_ref : (1, T + 2*pad, Cin)  zero-padded input, bf16, channels-last
    m_ref  : (1, T, 1)            float mask
    refs   : w_0, b_0, ..., w_{H-1}, b_{H-1}, w_cls, b_cls, o_ref, act_scratch
      w_l  : (K*Cin_l, Cout_l)    bf16 weights, tap-major rows
      b_l  : (1, Cout_l)          f32 bias
      o_ref: (1, T, Ncls_pad)     f32 output (classes padded to 128 -> lane-dense)
      act  : (T + 2*pad, feat)    bf16 VMEM scratch for inter-layer activations
    """
    o_ref = refs[-2]
    act_ref = refs[-1]
    wb = refs[:-2]

    T = o_ref.shape[1]
    K = 2 * pad + 1
    mask = m_ref[0]                                           # (T, 1) f32

    def conv(cur, w_ref, b_ref):
        # cur: (T + 2*pad, C) bf16 value.  One MXU matmul per tap, accumulated
        # in f32 -- no (T, K*C) concat temporary is ever built.
        C = cur.shape[-1]
        acc = jnp.dot(cur[0:T, :], w_ref[0:C, :],
                      preferred_element_type=jnp.float32)
        for k in range(1, K):
            acc = acc + jnp.dot(cur[k:k + T, :], w_ref[k * C:(k + 1) * C, :],
                                preferred_element_type=jnp.float32)
        return (acc + b_ref[0][None, :]) * mask               # bias, then mask

    if num_hidden > 0 and pad > 0:
        # Zero only the 2*pad halo rows (this reproduces the conv zero padding
        # between the fused layers); the interior rows are fully overwritten
        # every layer.  Done on every grid step (a few rows, ~free) rather than
        # only at program_id==0 so it stays correct if the batch axis is
        # sharded across TensorCores (megacore) and a core never runs step 0.
        zero_halo = jnp.zeros((pad, act_ref.shape[1]), act_ref.dtype)
        act_ref[0:pad, :] = zero_halo
        act_ref[pad + T:, :] = zero_halo

    cur = xp_ref[0]                                           # (T + 2*pad, Cin) bf16
    for layer in range(num_hidden):                           # static unroll (small)
        h = jnp.maximum(conv(cur, wb[2 * layer], wb[2 * layer + 1]), 0.0)  # ReLU
        act_ref[pad:pad + T, :] = h.astype(act_ref.dtype)     # stays in VMEM (bf16)
        cur = act_ref[...]                                    # padded activation

    logits = conv(cur, wb[-2], wb[-1])                        # (T, Ncls_pad) f32
    o_ref[0] = logits.astype(o_ref.dtype)


# ---------------------------------------------------------------------------
# Per-level wrapper: one pallas_call runs the whole head for that level
# ---------------------------------------------------------------------------
def _vmem_limit_bytes(T, pad, cin, feat, ncls_pad, w_shapes):
    """Rough per-step VMEM footprint: double-buffered blocks + scratch + temps."""
    def lanes(c):
        return _round_up(max(int(c), 1), 128)

    total = 0
    total += 2 * (T + 2 * pad) * lanes(cin) * 2          # xp block (bf16, x2 buffers)
    total += 2 * _round_up(T, 8) * 128 * 4               # mask block (lane-padded f32)
    total += 2 * T * lanes(ncls_pad) * 4                 # output block (f32, x2 buffers)
    total += (T + 2 * pad) * lanes(feat) * 2             # activation scratch (bf16)
    for rows, cols in w_shapes:                          # weights + biases (x2 buffers)
        total += 2 * (rows * lanes(cols) * 2 + 8 * lanes(cols) * 4)
    total += 3 * T * lanes(max(feat, ncls_pad)) * 4      # in-kernel f32 temporaries
    return total


def cls_head_level(x_nct, mask_n1t, head_w, head_b, cls_w, cls_b,
                   *, pad, num_classes):
    """x_nct: [B, C, T]; mask_n1t: [B, 1, T] bool.  Returns [B, num_classes, T]."""
    B, Cin, T = x_nct.shape
    num_hidden = len(head_w)
    feat = head_w[0].shape[1] if num_hidden > 0 else Cin
    ncls_pad = cls_w.shape[1]

    # NCT -> NTC (channels on lanes); bf16 input halves HBM traffic.
    x = jnp.transpose(x_nct, (0, 2, 1)).astype(jnp.bfloat16)          # [B, T, Cin]
    m = jnp.transpose(mask_n1t, (0, 2, 1)).astype(jnp.float32)        # [B, T, 1]
    xp = jnp.pad(x, ((0, 0), (pad, pad), (0, 0)))                     # one pad per level

    kernel = functools.partial(_cls_head_fused_kernel,
                               num_hidden=num_hidden, pad=pad)

    in_specs = [
        pl.BlockSpec((1, T + 2 * pad, Cin), lambda i: (i, 0, 0)),
        pl.BlockSpec((1, T, 1), lambda i: (i, 0, 0)),
    ]
    operands = [xp, m]
    w_shapes = []
    for w, b in zip(head_w, head_b):
        in_specs.append(pl.BlockSpec(w.shape, lambda i: (0, 0)))
        in_specs.append(pl.BlockSpec(b.shape, lambda i: (0, 0)))
        operands += [w, b]
        w_shapes.append(w.shape)
    in_specs.append(pl.BlockSpec(cls_w.shape, lambda i: (0, 0)))
    in_specs.append(pl.BlockSpec(cls_b.shape, lambda i: (0, 0)))
    operands += [cls_w, cls_b]
    w_shapes.append(cls_w.shape)

    vmem_limit = _vmem_limit_bytes(T, pad, Cin, feat, ncls_pad, w_shapes)
    vmem_limit = min(max(int(1.5 * vmem_limit) + (8 << 20), 32 << 20), 100 << 20)

    # TODO(synk): for very long FPN levels (and for v7x: 64 MiB VMEM, 2 TCs,
    #   small B), add a T-block grid axis with a (num_layers*pad)-row recomputed
    #   halo so the per-step footprint stays well under the scoped VMEM limit
    #   and both TensorCores get work; whole-T blocks are fine at these sizes.
    out = pl.pallas_call(
        kernel,
        out_shape=jax.ShapeDtypeStruct((B, T, ncls_pad), jnp.float32),
        grid_spec=pltpu.PrefetchScalarGridSpec(
            num_scalar_prefetch=0,
            grid=(B,),
            in_specs=in_specs,
            out_specs=pl.BlockSpec((1, T, ncls_pad), lambda i: (i, 0, 0)),
            scratch_shapes=[pltpu.VMEM((T + 2 * pad, feat), jnp.bfloat16)],
        ),
        compiler_params=pltpu.CompilerParams(
            dimension_semantics=("parallel",),
            vmem_limit_bytes=vmem_limit),
    )(*operands)

    # Lane-dense [B, T, ncls_pad] kernel output -> back to PyTorch NCT layout,
    # keeping only the real classes.
    return jnp.transpose(out, (0, 2, 1))[:, :num_classes, :]


# ---------------------------------------------------------------------------
# Pure-JAX reference (mirrors the kernel's numeric path: bf16 operands, f32 acc)
# ---------------------------------------------------------------------------
def _reference_level(x_nct, mask_n1t, head_w, head_b, cls_w, cls_b,
                     *, pad, num_classes):
    K = 2 * pad + 1
    x = jnp.transpose(x_nct, (0, 2, 1)).astype(jnp.bfloat16).astype(jnp.float32)
    m = jnp.transpose(mask_n1t, (0, 2, 1)).astype(jnp.float32)
    T = x.shape[1]

    def conv(cur, w, b):
        C = cur.shape[-1]
        xp = jnp.pad(cur, ((0, 0), (pad, pad), (0, 0)))
        wf = w.astype(jnp.float32)
        acc = sum(jnp.einsum("btc,cd->btd", xp[:, k:k + T, :],
                             wf[k * C:(k + 1) * C]) for k in range(K))
        return (acc + b[0][None, None, :]) * m

    cur = x
    for w, b in zip(head_w, head_b):
        cur = jnp.maximum(conv(cur, w, b), 0.0)
        cur = cur.astype(jnp.bfloat16).astype(jnp.float32)   # bf16 scratch round-trip
    logits = conv(cur, cls_w, cls_b)[..., :num_classes]
    return jnp.transpose(logits, (0, 2, 1))


# ---------------------------------------------------------------------------
# ClsHead module (parameters + per-level driver)
# ---------------------------------------------------------------------------
class ClsHeadPallas:
    def __init__(self, input_dim, feat_dim, num_classes, prior_prob=0.01,
                 num_layers=3, kernel_size=3, empty_cls=(), key=None):
        assert kernel_size % 2 == 1
        # NOTE: num_layers == 1 only works when input_dim == feat_dim (same
        # implicit constraint as the PyTorch module, whose cls_head expects
        # feat_dim input channels).
        if key is None:
            key = jax.random.PRNGKey(0)
        self.num_classes = num_classes
        self.kernel_size = kernel_size
        self.pad = kernel_size // 2
        self.num_classes_pad = _round_up(num_classes, 128)  # lane-dense output

        # TODO(synk): with_ln=True (LayerNorm between conv and ReLU) is not
        #   implemented; this covers the default Identity-norm path only.
        self.head_w, self.head_b = [], []
        k = key
        for idx in range(num_layers - 1):
            in_dim = input_dim if idx == 0 else feat_dim
            k, sub = jax.random.split(k)
            w = 0.02 * jax.random.normal(
                sub, (kernel_size, in_dim, feat_dim), jnp.float32)
            # (K, Cin, Cout) -> (K*Cin, Cout), tap-major rows; bf16 for MXU/HBM.
            self.head_w.append(
                w.reshape(kernel_size * in_dim, feat_dim).astype(jnp.bfloat16))
            self.head_b.append(jnp.zeros((1, feat_dim), jnp.float32))

        k, sub = jax.random.split(k)
        cls_w = 0.02 * jax.random.normal(
            sub, (kernel_size, feat_dim, num_classes), jnp.float32)
        cls_w = cls_w.reshape(kernel_size * feat_dim, num_classes)
        cls_w = jnp.pad(cls_w, ((0, 0), (0, self.num_classes_pad - num_classes)))
        self.cls_w = cls_w.astype(jnp.bfloat16)

        bias_value = -math.log((1 - prior_prob) / prior_prob)
        cls_b = jnp.full((num_classes,), bias_value, jnp.float32)
        if len(empty_cls) > 0:
            empty_value = -math.log((1 - 1e-06) / 1e-06)
            cls_b = cls_b.at[jnp.asarray(list(empty_cls))].set(empty_value)
        self.cls_b = jnp.pad(
            cls_b, (0, self.num_classes_pad - num_classes)).reshape(1, -1)

    def __call__(self, fpn_feats, fpn_masks):
        """fpn_feats: list of [B, C, T_l]; fpn_masks: list of [B, 1, T_l] bool."""
        assert len(fpn_feats) == len(fpn_masks)
        out_logits = tuple()
        for cur_feat, cur_mask in zip(fpn_feats, fpn_masks):
            out_logits += (cls_head_level(
                cur_feat, cur_mask, self.head_w, self.head_b,
                self.cls_w, self.cls_b,
                pad=self.pad, num_classes=self.num_classes),)
        return out_logits


if __name__ == "__main__":
    key = jax.random.PRNGKey(0)
    B, input_dim, feat_dim, num_classes = 2, 32, 32, 8
    level_lengths = (16, 8)  # two FPN levels

    k_feat, k_param = jax.random.split(key)
    fpn_feats, fpn_masks = [], []
    for T in level_lengths:
        k_feat, sub = jax.random.split(k_feat)
        fpn_feats.append(jax.random.normal(sub, (B, input_dim, T), jnp.float32))
        # valid lengths: first sample full, second sample 3/4 of T
        t_idx = jnp.arange(T)[None, None, :]
        lens = jnp.asarray([T, (3 * T) // 4]).reshape(B, 1, 1)
        fpn_masks.append(t_idx < lens)  # [B, 1, T] bool

    head = ClsHeadPallas(input_dim, feat_dim, num_classes, key=k_param)
    out_logits = head(fpn_feats, fpn_masks)
    out_logits = jax.block_until_ready(out_logits)

    for li, (logits, feat_in, msk) in enumerate(
            zip(out_logits, fpn_feats, fpn_masks)):
        assert logits.shape == (B, num_classes, level_lengths[li]), logits.shape
        assert bool(jnp.all(jnp.isfinite(logits)))
        ref = _reference_level(feat_in, msk, head.head_w, head.head_b,
                               head.cls_w, head.cls_b,
                               pad=head.pad, num_classes=num_classes)
        max_err = float(jnp.max(jnp.abs(logits - ref)))
        assert jnp.allclose(logits, ref, atol=1e-2, rtol=1e-2), max_err
    print("KERNEL_OK")
</pallas_src>

<mosaic_0001>
module attributes {stable_mosaic.version = 11 : i64} {
  func.func @_cls_head_fused_kernel(%arg0: i32, %arg1: memref<1x18x32xbf16, #tpu.memory_space<vmem>>, %arg2: memref<1x16x1xf32, #tpu.memory_space<vmem>>, %arg3: memref<96x32xbf16, #tpu.memory_space<vmem>>, %arg4: memref<1x32xf32, #tpu.memory_space<vmem>>, %arg5: memref<96x32xbf16, #tpu.memory_space<vmem>>, %arg6: memref<1x32xf32, #tpu.memory_space<vmem>>, %arg7: memref<96x128xbf16, #tpu.memory_space<vmem>>, %arg8: memref<1x128xf32, #tpu.memory_space<vmem>>, %arg9: memref<1x16x128xf32, #tpu.memory_space<vmem>>, %arg10: memref<18x32xbf16, #tpu.memory_space<vmem>>) attributes {dimension_semantics = [#tpu.dimension_semantics<parallel>], iteration_bounds = array<i64: 2>, scalar_prefetch = 0 : i64, scratch_operands = 1 : i64, tpu.core_type = #tpu.core_type<tc>, window_params = [{transform_indices = @transform_0, window_bounds = array<i64: 1, 18, 32>}, {transform_indices = @transform_1, window_bounds = array<i64: 1, 16, 1>}, {pipeline_mode = #tpu.pipeline_mode<synchronous>, transform_indices = @transform_2, window_bounds = array<i64: 96, 32>}, {pipeline_mode = #tpu.pipeline_mode<synchronous>, transform_indices = @transform_3, window_bounds = array<i64: 1, 32>}, {pipeline_mode = #tpu.pipeline_mode<synchronous>, transform_indices = @transform_4, window_bounds = array<i64: 96, 32>}, {pipeline_mode = #tpu.pipeline_mode<synchronous>, transform_indices = @transform_5, window_bounds = array<i64: 1, 32>}, {pipeline_mode = #tpu.pipeline_mode<synchronous>, transform_indices = @transform_6, window_bounds = array<i64: 96, 128>}, {pipeline_mode = #tpu.pipeline_mode<synchronous>, transform_indices = @transform_7, window_bounds = array<i64: 1, 128>}, {transform_indices = @transform_8, window_bounds = array<i64: 1, 16, 128>}]} {
    %c0 = arith.constant 0 : index
    %c0_0 = arith.constant 0 : index
    %c0_1 = arith.constant 0 : index
    %0 = vector.load %arg2[%c0, %c0_0, %c0_1] : memref<1x16x1xf32, #tpu.memory_space<vmem>>, vector<1x16x1xf32>
    %1 = vector.shape_cast %0 : vector<1x16x1xf32> to vector<16x1xf32>
    %cst = arith.constant 0.000000e+00 : bf16
    %2 = vector.broadcast %cst : bf16 to vector<1x32xbf16>
    %c0_2 = arith.constant 0 : index
    %c0_3 = arith.constant 0 : index
    %3 = vector.load %arg10[%c0_2, %c0_3] : memref<18x32xbf16, #tpu.memory_space<vmem>>, vector<1x32xbf16>
    tpu.vector_store %arg10[%c0_2, %c0_3], %2 {strides = array<i32>} : memref<18x32xbf16, #tpu.memory_space<vmem>>, vector<1x32xbf16>,
    %c17 = arith.constant 17 : index
    %c0_4 = arith.constant 0 : index
    %4 = vector.load %arg10[%c17, %c0_4] : memref<18x32xbf16, #tpu.memory_space<vmem>>, vector<1x32xbf16>
    tpu.vector_store %arg10[%c17, %c0_4], %2 {strides = array<i32>} : memref<18x32xbf16, #tpu.memory_space<vmem>>, vector<1x32xbf16>,
    %c0_5 = arith.constant 0 : index
    %c0_6 = arith.constant 0 : index
    %c0_7 = arith.constant 0 : index
    %5 = vector.load %arg1[%c0_5, %c0_6, %c0_7] : memref<1x18x32xbf16, #tpu.memory_space<vmem>>, vector<1x18x32xbf16>
    %6 = vector.shape_cast %5 : vector<1x18x32xbf16> to vector<18x32xbf16>
    %7 = vector.extract_strided_slice %6 {offsets = [0, 0], sizes = [16, 32], strides = [1, 1]} : vector<18x32xbf16> to vector<16x32xbf16>
    %c0_8 = arith.constant 0 : index
    %c0_9 = arith.constant 0 : index
    %8 = vector.load %arg3[%c0_8, %c0_9] : memref<96x32xbf16, #tpu.memory_space<vmem>>, vector<32x32xbf16>
    %cst_10 = arith.constant dense<0.000000e+00> : vector<16x32xf32>
    %9 = tpu.matmul %7, %8, %cst_10 {dimension_numbers = #tpu.dot_dimension_numbers<[1], [0], [0], [1], [0, 0, 1, 1], [], []>} : vector<16x32xbf16>, vector<32x32xbf16>, vector<16x32xf32> -> vector<16x32xf32>
    %10 = vector.extract_strided_slice %6 {offsets = [1, 0], sizes = [16, 32], strides = [1, 1]} : vector<18x32xbf16> to vector<16x32xbf16>
    %c32 = arith.constant 32 : index
    %c0_11 = arith.constant 0 : index
    %11 = vector.load %arg3[%c32, %c0_11] : memref<96x32xbf16, #tpu.memory_space<vmem>>, vector<32x32xbf16>
    %cst_12 = arith.constant dense<0.000000e+00> : vector<16x32xf32>
    %12 = tpu.matmul %10, %11, %cst_12 {dimension_numbers = #tpu.dot_dimension_numbers<[1], [0], [0], [1], [0, 0, 1, 1], [], []>} : vector<16x32xbf16>, vector<32x32xbf16>, vector<16x32xf32> -> vector<16x32xf32>
    %13 = arith.addf %9, %12 : vector<16x32xf32>
    %14 = vector.extract_strided_slice %6 {offsets = [2, 0], sizes = [16, 32], strides = [1, 1]} : vector<18x32xbf16> to vector<16x32xbf16>
    %c64 = arith.constant 64 : index
    %c0_13 = arith.constant 0 : index
    %15 = vector.load %arg3[%c64, %c0_13] : memref<96x32xbf16, #tpu.memory_space<vmem>>, vector<32x32xbf16>
    %cst_14 = arith.constant dense<0.000000e+00> : vector<16x32xf32>
    %16 = tpu.matmul %14, %15, %cst_14 {dimension_numbers = #tpu.dot_dimension_numbers<[1], [0], [0], [1], [0, 0, 1, 1], [], []>} : vector<16x32xbf16>, vector<32x32xbf16>, vector<16x32xf32> -> vector<16x32xf32>
    %17 = arith.addf %13, %16 : vector<16x32xf32>
    %c0_15 = arith.constant 0 : index
    %c0_16 = arith.constant 0 : index
    %18 = vector.load %arg4[%c0_15, %c0_16] : memref<1x32xf32, #tpu.memory_space<vmem>>, vector<1x32xf32>
    %19 = vector.shape_cast %18 : vector<1x32xf32> to vector<32xf32>
    %20 = vector.shape_cast %19 : vector<32xf32> to vector<1x32xf32>
    %21 = vector.broadcast %20 : vector<1x32xf32> to vector<16x32xf32>
    %22 = arith.addf %17, %21 : vector<16x32xf32>
    %23 = vector.broadcast %1 : vector<16x1xf32> to vector<16x32xf32>
    %24 = arith.mulf %22, %23 : vector<16x32xf32>
    %cst_17 = arith.constant 0.000000e+00 : f32
    %25 = vector.broadcast %cst_17 : f32 to vector<16x32xf32>
    %26 = arith.maximumf %24, %25 : vector<16x32xf32>
    %27 = arith.truncf %26 : vector<16x32xf32> to vector<16x32xbf16>
    %c1 = arith.constant 1 : index
    %c0_18 = arith.constant 0 : index
    %28 = vector.load %arg10[%c1, %c0_18] : memref<18x32xbf16, #tpu.memory_space<vmem>>, vector<16x32xbf16>
    tpu.vector_store %arg10[%c1, %c0_18], %27 {strides = array<i32>} : memref<18x32xbf16, #tpu.memory_space<vmem>>, vector<16x32xbf16>,
    %c0_19 = arith.constant 0 : index
    %c0_20 = arith.constant 0 : index
    %29 = vector.load %arg10[%c0_19, %c0_20] : memref<18x32xbf16, #tpu.memory_space<vmem>>, vector<18x32xbf16>
    %30 = vector.extract_strided_slice %29 {offsets = [0, 0], sizes = [16, 32], strides = [1, 1]} : vector<18x32xbf16> to vector<16x32xbf16>
    %c0_21 = arith.constant 0 : index
    %c0_22 = arith.constant 0 : index
    %31 = vector.load %arg5[%c0_21, %c0_22] : memref<96x32xbf16, #tpu.memory_space<vmem>>, vector<32x32xbf16>
    %cst_23 = arith.constant dense<0.000000e+00> : vector<16x32xf32>
    %32 = tpu.matmul %30, %31, %cst_23 {dimension_numbers = #tpu.dot_dimension_numbers<[1], [0], [0], [1], [0, 0, 1, 1], [], []>} : vector<16x32xbf16>, vector<32x32xbf16>, vector<16x32xf32> -> vector<16x32xf32>
    %33 = vector.extract_strided_slice %29 {offsets = [1, 0], sizes = [16, 32], strides = [1, 1]} : vector<18x32xbf16> to vector<16x32xbf16>
    %c32_24 = arith.constant 32 : index
    %c0_25 = arith.constant 0 : index
    %34 = vector.load %arg5[%c32_24, %c0_25] : memref<96x32xbf16, #tpu.memory_space<vmem>>, vector<32x32xbf16>
    %cst_26 = arith.constant dense<0.000000e+00> : vector<16x32xf32>
    %35 = tpu.matmul %33, %34, %cst_26 {dimension_numbers = #tpu.dot_dimension_numbers<[1], [0], [0], [1], [0, 0, 1, 1], [], []>} : vector<16x32xbf16>, vector<32x32xbf16>, vector<16x32xf32> -> vector<16x32xf32>
    %36 = arith.addf %32, %35 : vector<16x32xf32>
    %37 = vector.extract_strided_slice %29 {offsets = [2, 0], sizes = [16, 32], strides = [1, 1]} : vector<18x32xbf16> to vector<16x32xbf16>
    %c64_27 = arith.constant 64 : index
    %c0_28 = arith.constant 0 : index
    %38 = vector.load %arg5[%c64_27, %c0_28] : memref<96x32xbf16, #tpu.memory_space<vmem>>, vector<32x32xbf16>
    %cst_29 = arith.constant dense<0.000000e+00> : vector<16x32xf32>
    %39 = tpu.matmul %37, %38, %cst_29 {dimension_numbers = #tpu.dot_dimension_numbers<[1], [0], [0], [1], [0, 0, 1, 1], [], []>} : vector<16x32xbf16>, vector<32x32xbf16>, vector<16x32xf32> -> vector<16x32xf32>
    %40 = arith.addf %36, %39 : vector<16x32xf32>
    %c0_30 = arith.constant 0 : index
    %c0_31 = arith.constant 0 : index
    %41 = vector.load %arg6[%c0_30, %c0_31] : memref<1x32xf32, #tpu.memory_space<vmem>>, vector<1x32xf32>
    %42 = vector.shape_cast %41 : vector<1x32xf32> to vector<32xf32>
    %43 = vector.shape_cast %42 : vector<32xf32> to vector<1x32xf32>
    %44 = vector.broadcast %43 : vector<1x32xf32> to vector<16x32xf32>
    %45 = arith.addf %40, %44 : vector<16x32xf32>
    %46 = vector.broadcast %1 : vector<16x1xf32> to vector<16x32xf32>
    %47 = arith.mulf %45, %46 : vector<16x32xf32>
    %cst_32 = arith.constant 0.000000e+00 : f32
    %48 = vector.broadcast %cst_32 : f32 to vector<16x32xf32>
    %49 = arith.maximumf %47, %48 : vector<16x32xf32>
    %50 = arith.truncf %49 : vector<16x32xf32> to vector<16x32xbf16>
    %c1_33 = arith.constant 1 : index
    %c0_34 = arith.constant 0 : index
    %51 = vector.load %arg10[%c1_33, %c0_34] : memref<18x32xbf16, #tpu.memory_space<vmem>>, vector<16x32xbf16>
    tpu.vector_store %arg10[%c1_33, %c0_34], %50 {strides = array<i32>} : memref<18x32xbf16, #tpu.memory_space<vmem>>, vector<16x32xbf16>,
    %c0_35 = arith.constant 0 : index
    %c0_36 = arith.constant 0 : index
    %52 = vector.load %arg10[%c0_35, %c0_36] : memref<18x32xbf16, #tpu.memory_space<vmem>>, vector<18x32xbf16>
    %53 = vector.extract_strided_slice %52 {offsets = [0, 0], sizes = [16, 32], strides = [1, 1]} : vector<18x32xbf16> to vector<16x32xbf16>
    %c0_37 = arith.constant 0 : index
    %c0_38 = arith.constant 0 : index
    %54 = vector.load %arg7[%c0_37, %c0_38] : memref<96x128xbf16, #tpu.memory_space<vmem>>, vector<32x128xbf16>
    %cst_39 = arith.constant dense<0.000000e+00> : vector<16x128xf32>
    %55 = tpu.matmul %53, %54, %cst_39 {dimension_numbers = #tpu.dot_dimension_numbers<[1], [0], [0], [1], [0, 0, 1, 1], [], []>} : vector<16x32xbf16>, vector<32x128xbf16>, vector<16x128xf32> -> vector<16x128xf32>
    %56 = vector.extract_strided_slice %52 {offsets = [1, 0], sizes = [16, 32], strides = [1, 1]} : vector<18x32xbf16> to vector<16x32xbf16>
    %c32_40 = arith.constant 32 : index
    %c0_41 = arith.constant 0 : index
    %57 = vector.load %arg7[%c32_40, %c0_41] : memref<96x128xbf16, #tpu.memory_space<vmem>>, vector<32x128xbf16>
    %cst_42 = arith.constant dense<0.000000e+00> : vector<16x128xf32>
    %58 = tpu.matmul %56, %57, %cst_42 {dimension_numbers = #tpu.dot_dimension_numbers<[1], [0], [0], [1], [0, 0, 1, 1], [], []>} : vector<16x32xbf16>, vector<32x128xbf16>, vector<16x128xf32> -> vector<16x128xf32>
    %59 = arith.addf %55, %58 : vector<16x128xf32>
    %60 = vector.extract_strided_slice %52 {offsets = [2, 0], sizes = [16, 32], strides = [1, 1]} : vector<18x32xbf16> to vector<16x32xbf16>
    %c64_43 = arith.constant 64 : index
    %c0_44 = arith.constant 0 : index
    %61 = vector.load %arg7[%c64_43, %c0_44] : memref<96x128xbf16, #tpu.memory_space<vmem>>, vector<32x128xbf16>
    %cst_45 = arith.constant dense<0.000000e+00> : vector<16x128xf32>
    %62 = tpu.matmul %60, %61, %cst_45 {dimension_numbers = #tpu.dot_dimension_numbers<[1], [0], [0], [1], [0, 0, 1, 1], [], []>} : vector<16x32xbf16>, vector<32x128xbf16>, vector<16x128xf32> -> vector<16x128xf32>
    %63 = arith.addf %59, %62 : vector<16x128xf32>
    %c0_46 = arith.constant 0 : index
    %c0_47 = arith.constant 0 : index
    %64 = vector.load %arg8[%c0_46, %c0_47] : memref<1x128xf32, #tpu.memory_space<vmem>>, vector<1x128xf32>
    %65 = vector.shape_cast %64 : vector<1x128xf32> to vector<128xf32>
    %66 = vector.shape_cast %65 : vector<128xf32> to vector<1x128xf32>
    %67 = vector.broadcast %66 : vector<1x128xf32> to vector<16x128xf32>
    %68 = arith.addf %63, %67 : vector<16x128xf32>
    %69 = vector.broadcast %1 : vector<16x1xf32> to vector<16x128xf32>
    %70 = arith.mulf %68, %69 : vector<16x128xf32>
    %c0_48 = arith.constant 0 : index
    %c0_49 = arith.constant 0 : index
    %c0_50 = arith.constant 0 : index
    %71 = vector.load %arg9[%c0_48, %c0_49, %c0_50] : memref<1x16x128xf32, #tpu.memory_space<vmem>>, vector<1x16x128xf32>
    %72 = vector.shape_cast %71 : vector<1x16x128xf32> to vector<16x128xf32>
    %73 = vector.shape_cast %70 : vector<16x128xf32> to vector<1x16x128xf32>
    tpu.vector_store %arg9[%c0_48, %c0_49, %c0_50], %73 {strides = array<i32>} : memref<1x16x128xf32, #tpu.memory_space<vmem>>, vector<1x16x128xf32>,
    return
  }
  func.func @transform_0(%arg0: i32) -> (i32, i32, i32) {
    %c0_i32 = arith.constant 0 : i32
    %c0_i32_0 = arith.constant 0 : i32
    %c0_i32_1 = arith.constant 0 : i32
    return %arg0, %c0_i32, %c0_i32_0 : i32, i32, i32
  }
  func.func @transform_1(%arg0: i32) -> (i32, i32, i32) {
    %c0_i32 = arith.constant 0 : i32
    %c0_i32_0 = arith.constant 0 : i32
    %c0_i32_1 = arith.constant 0 : i32
    return %arg0, %c0_i32, %c0_i32_0 : i32, i32, i32
  }
  func.func @transform_2(%arg0: i32) -> (i32, i32) {
    %c0_i32 = arith.constant 0 : i32
    %c0_i32_0 = arith.constant 0 : i32
    %c0_i32_1 = arith.constant 0 : i32
    return %c0_i32, %c0_i32_0 : i32, i32
  }
  func.func @transform_3(%arg0: i32) -> (i32, i32) {
    %c0_i32 = arith.constant 0 : i32
    %c0_i32_0 = arith.constant 0 : i32
    %c0_i32_1 = arith.constant 0 : i32
    return %c0_i32, %c0_i32_0 : i32, i32
  }
  func.func @transform_4(%arg0: i32) -> (i32, i32) {
    %c0_i32 = arith.constant 0 : i32
    %c0_i32_0 = arith.constant 0 : i32
    %c0_i32_1 = arith.constant 0 : i32
    return %c0_i32, %c0_i32_0 : i32, i32
  }
  func.func @transform_5(%arg0: i32) -> (i32, i32) {
    %c0_i32 = arith.constant 0 : i32
    %c0_i32_0 = arith.constant 0 : i32
    %c0_i32_1 = arith.constant 0 : i32
    return %c0_i32, %c0_i32_0 : i32, i32
  }
  func.func @transform_6(%arg0: i32) -> (i32, i32) {
    %c0_i32 = arith.constant 0 : i32
    %c0_i32_0 = arith.constant 0 : i32
    %c0_i32_1 = arith.constant 0 : i32
    return %c0_i32, %c0_i32_0 : i32, i32
  }
  func.func @transform_7(%arg0: i32) -> (i32, i32) {
    %c0_i32 = arith.constant 0 : i32
    %c0_i32_0 = arith.constant 0 : i32
    %c0_i32_1 = arith.constant 0 : i32
    return %c0_i32, %c0_i32_0 : i32, i32
  }
  func.func @transform_8(%arg0: i32) -> (i32, i32, i32) {
    %c0_i32 = arith.constant 0 : i32
    %c0_i32_0 = arith.constant 0 : i32
    %c0_i32_1 = arith.constant 0 : i32
    return %arg0, %c0_i32, %c0_i32_0 : i32, i32, i32
  }
}

</mosaic_0001>

<llo_original>
// kernel: tpu_custom_call.1
$region0: #{tpu_custom_call.1}
  #allocation0 [shape = 'u32[]', space=smem, size = 0x4, offset = 0x4, fixed_abs, tag = 'smem constant byte address 0x4 - core index']
  #allocation1 [shape = 'u32[144,128]{1,0:T(1,128)}', space=vmem, size = 0x12000, scoped, tag = 'internal scratch']
  #allocation2 [shape = 'bf16[18,32]{1,0:T(8,128)(2,1)}', space=vmem, size = 0x1800, scoped, tag = 'scratch operand']
  %s0 = inlined_call_operand.vmem [shape: bf16[2,18,32], index: 0, kind: input, shape index: {}]
  %s1 = inlined_call_operand.vmem [shape: f32[2,16,1], index: 1, kind: input, shape index: {}]
  %s2 = inlined_call_operand.vmem [shape: bf16[96,32], index: 2, kind: input, shape index: {}]
  %s3 = inlined_call_operand.vmem [shape: f32[1,32], index: 3, kind: input, shape index: {}]
  %s4 = inlined_call_operand.vmem [shape: bf16[96,32], index: 4, kind: input, shape index: {}]
  %s5 = inlined_call_operand.vmem [shape: f32[1,32], index: 5, kind: input, shape index: {}]
  %s6 = inlined_call_operand.vmem [shape: bf16[96,128], index: 6, kind: input, shape index: {}]
  %s7 = inlined_call_operand.vmem [shape: f32[1,128], index: 7, kind: input, shape index: {}]
  %s8 = inlined_call_operand.hbm [shape: f32[2,16,128], index: 8, kind: output, shape index: {}]
  %s9 = sld [smem:[#allocation0]]
  $region65: #{tpu_custom_call.1} parent=0
    _
  %s11 = ssub.s32 1, %s9
  %s12 = scalar_select 0, %s11, %s9
  $region1: #{tpu_custom_call.1} parent=0
    #allocation3 [shape = 'u8[16384]{0}', space=vmem, size = 0x4000, scoped, tag = 'output window, operand 0']
    #allocation4 [shape = 's32[2]{0}', space=sflag, size = 0x8, scoped, tag = 'scoped memory for tpu_custom_call.1']
    %13 = vsyncpa [#allocation4], 0
    %s14 = scalar_lea.sflag [#allocation4], 1
    %15 = vsyncpa %s14, 0
    loop: start=0, step=1, limit=4
    $region2: #{tpu_custom_call.1} parent=1 // loop_pre_header
      _
    $region3: #{tpu_custom_call.1} parent=1 // loop_header
      %s17 = sphi 0, %s21
      %p18 = scmp.ge.s32.totalorder %s17, 4
      %s27 = sphi 0, %s29
      %s30 = sphi 0, %s27
      %s31 = sphi 0, %s30
      %s47 = sphi 0, %s31
      %s53 = sphi 0, %s55
      %s56 = sphi 0, %s53
      %s57 = sphi 0, %s56
      %s73 = sphi 0, %s57
      %s77 = sphi 0, %s77
      %s79 = sphi 0, %s77
      %s80 = sphi 0, %s79
      %s94 = sphi 0, %s80
      %s98 = sphi 0, %s98
      %s100 = sphi 0, %s98
      %s101 = sphi 0, %s100
      %s115 = sphi 0, %s101
      %s119 = sphi 0, %s119
      %s121 = sphi 0, %s119
      %s122 = sphi 0, %s121
      %s136 = sphi 0, %s122
      %s140 = sphi 0, %s140
      %s142 = sphi 0, %s140
      %s143 = sphi 0, %s142
      %s157 = sphi 0, %s143
      %s161 = sphi 0, %s161
      %s163 = sphi 0, %s161
      %s164 = sphi 0, %s163
      %s178 = sphi 0, %s164
      %s182 = sphi 0, %s182
      %s184 = sphi 0, %s182
      %s185 = sphi 0, %s184
      %s199 = sphi 0, %s185
      %s205 = sphi 0, %s207
      %s208 = sphi 0, %s205
      %s209 = sphi 0, %s208
      %s225 = sphi 0, %s209
    $region4: #{tpu_custom_call.1} parent=1 // loop_header_branch
      %20 = sbr.rel (%p18) target = $region8
    $region5: #{tpu_custom_call.1} parent=1 // loop_body
      %s22 = ssub.s32 %s17, 1
      %s23 = ssub.s32 %s17, 2
      %s24 = sadd.s32 %s17, 1
      %s25 = ssub.s32 %s17, %s24
      %p26 = scmp.eq.s32.totalorder %s25, 0
      %s28 = sadd.s32 %s27, 1
      %s29 = scalar_select %p26, %s27, %s28
      %p32 = pneg %p26
      %p33 = scmp.eq.s32.totalorder %s17, 1
      %p34 = por %p32, %p33
      %p35 = scmp.ne.s32.totalorder %s27, %s30
      %p36 = scmp.eq.s32.totalorder %s17, 0
      %p37 = por %p35, %p36
      %p38 = scmp.ne.s32.totalorder %s27, %s30
      %p39 = scmp.eq.s32.totalorder %s22, 1
      %p40 = por %p38, %p39
      %p41 = scmp.ne.s32.totalorder %s30, %s31
      %p42 = scmp.eq.s32.totalorder %s22, 0
      %p43 = por %p41, %p42
      %p44 = scmp.ne.s32.totalorder %s30, %s31
      %p45 = scmp.eq.s32.totalorder %s23, 1
      %p46 = por %p44, %p45
      %p48 = scmp.ne.s32.totalorder %s31, %s47
      %p49 = scmp.eq.s32.totalorder %s23, 0
      %p50 = por %p48, %p49
      %s51 = ssub.s32 %s17, %s24
      %p52 = scmp.eq.s32.totalorder %s51, 0
      %s54 = sadd.s32 %s53, 1
      %s55 = scalar_select %p52, %s53, %s54
      %p58 = pneg %p52
      %p59 = scmp.eq.s32.totalorder %s17, 1
      %p60 = por %p58, %p59
      %p61 = scmp.ne.s32.totalorder %s53, %s56
      %p62 = scmp.eq.s32.totalorder %s17, 0
      %p63 = por %p61, %p62
      %p64 = scmp.ne.s32.totalorder %s53, %s56
      %p65 = scmp.eq.s32.totalorder %s22, 1
      %p66 = por %p64, %p65
      %p67 = scmp.ne.s32.totalorder %s56, %s57
      %p68 = scmp.eq.s32.totalorder %s22, 0
      %p69 = por %p67, %p68
      %p70 = scmp.ne.s32.totalorder %s56, %s57
      %p71 = scmp.eq.s32.totalorder %s23, 1
      %p72 = por %p70, %p71
      %p74 = scmp.ne.s32.totalorder %s57, %s73
      %p75 = scmp.eq.s32.totalorder %s23, 0
      %p76 = por %p74, %p75
      %s78 = sadd.s32 %s77, 1
      %p81 = scmp.eq.s32.totalorder %s17, 1
      %p82 = scmp.ne.s32.totalorder %s77, %s79
      %p83 = scmp.eq.s32.totalorder %s17, 0
      %p84 = por %p82, %p83
      %p85 = scmp.ne.s32.totalorder %s77, %s79
      %p86 = scmp.eq.s32.totalorder %s22, 1
      %p87 = por %p85, %p86
      %p88 = scmp.ne.s32.totalorder %s79, %s80
      %p89 = scmp.eq.s32.totalorder %s22, 0
      %p90 = por %p88, %p89
      %p91 = scmp.ne.s32.totalorder %s79, %s80
      %p92 = scmp.eq.s32.totalorder %s23, 1
      %p93 = por %p91, %p92
      %p95 = scmp.ne.s32.totalorder %s80, %s94
      %p96 = scmp.eq.s32.totalorder %s23, 0
      %p97 = por %p95, %p96
      %s99 = sadd.s32 %s98, 1
      %p102 = scmp.eq.s32.totalorder %s17, 1
      %p103 = scmp.ne.s32.totalorder %s98, %s100
      %p104 = scmp.eq.s32.totalorder %s17, 0
      %p105 = por %p103, %p104
      %p106 = scmp.ne.s32.totalorder %s98, %s100
      %p107 = scmp.eq.s32.totalorder %s22, 1
      %p108 = por %p106, %p107
      %p109 = scmp.ne.s32.totalorder %s100, %s101
      %p110 = scmp.eq.s32.totalorder %s22, 0
      %p111 = por %p109, %p110
      %p112 = scmp.ne.s32.totalorder %s100, %s101
      %p113 = scmp.eq.s32.totalorder %s23, 1
      %p114 = por %p112, %p113
      %p116 = scmp.ne.s32.totalorder %s101, %s115
      %p117 = scmp.eq.s32.totalorder %s23, 0
      %p118 = por %p116, %p117
      %s120 = sadd.s32 %s119, 1
      %p123 = scmp.eq.s32.totalorder %s17, 1
      %p124 = scmp.ne.s32.totalorder %s119, %s121
      %p125 = scmp.eq.s32.totalorder %s17, 0
      %p126 = por %p124, %p125
      %p127 = scmp.ne.s32.totalorder %s119, %s121
      %p128 = scmp.eq.s32.totalorder %s22, 1
      %p129 = por %p127, %p128
      %p130 = scmp.ne.s32.totalorder %s121, %s122
      %p131 = scmp.eq.s32.totalorder %s22, 0
      %p132 = por %p130, %p131
      %p133 = scmp.ne.s32.totalorder %s121, %s122
      %p134 = scmp.eq.s32.totalorder %s23, 1
      %p135 = por %p133, %p134
      %p137 = scmp.ne.s32.totalorder %s122, %s136
      %p138 = scmp.eq.s32.totalorder %s23, 0
      %p139 = por %p137, %p138
      %s141 = sadd.s32 %s140, 1
      %p144 = scmp.eq.s32.totalorder %s17, 1
      %p145 = scmp.ne.s32.totalorder %s140, %s142
      %p146 = scmp.eq.s32.totalorder %s17, 0
      %p147 = por %p145, %p146
      %p148 = scmp.ne.s32.totalorder %s140, %s142
      %p149 = scmp.eq.s32.totalorder %s22, 1
      %p150 = por %p148, %p149
      %p151 = scmp.ne.s32.totalorder %s142, %s143
      %p152 = scmp.eq.s32.totalorder %s22, 0
      %p153 = por %p151, %p152
      %p154 = scmp.ne.s32.totalorder %s142, %s143
      %p155 = scmp.eq.s32.totalorder %s23, 1
      %p156 = por %p154, %p155
      %p158 = scmp.ne.s32.totalorder %s143, %s157
      %p159 = scmp.eq.s32.totalorder %s23, 0
      %p160 = por %p158, %p159
      %s162 = sadd.s32 %s161, 1
      %p165 = scmp.eq.s32.totalorder %s17, 1
      %p166 = scmp.ne.s32.totalorder %s161, %s163
      %p167 = scmp.eq.s32.totalorder %s17, 0
      %p168 = por %p166, %p167
      %p169 = scmp.ne.s32.totalorder %s161, %s163
      %p170 = scmp.eq.s32.totalorder %s22, 1
      %p171 = por %p169, %p170
      %p172 = scmp.ne.s32.totalorder %s163, %s164
      %p173 = scmp.eq.s32.totalorder %s22, 0
      %p174 = por %p172, %p173
      %p175 = scmp.ne.s32.totalorder %s163, %s164
      %p176 = scmp.eq.s32.totalorder %s23, 1
      %p177 = por %p175, %p176
      %p179 = scmp.ne.s32.totalorder %s164, %s178
      %p180 = scmp.eq.s32.totalorder %s23, 0
      %p181 = por %p179, %p180
      %s183 = sadd.s32 %s182, 1
      %p186 = scmp.eq.s32.totalorder %s17, 1
      %p187 = scmp.ne.s32.totalorder %s182, %s184
      %p188 = scmp.eq.s32.totalorder %s17, 0
      %p189 = por %p187, %p188
      %p190 = scmp.ne.s32.totalorder %s182, %s184
      %p191 = scmp.eq.s32.totalorder %s22, 1
      %p192 = por %p190, %p191
      %p193 = scmp.ne.s32.totalorder %s184, %s185
      %p194 = scmp.eq.s32.totalorder %s22, 0
      %p195 = por %p193, %p194
      %p196 = scmp.ne.s32.totalorder %s184, %s185
      %p197 = scmp.eq.s32.totalorder %s23, 1
      %p198 = por %p196, %p197
      %p200 = scmp.ne.s32.totalorder %s185, %s199
      %p201 = scmp.eq.s32.totalorder %s23, 0
      %p202 = por %p200, %p201
      %s203 = ssub.s32 %s17, %s24
      %p204 = scmp.eq.s32.totalorder %s203, 0
      %s206 = sadd.s32 %s205, 1
      %s207 = scalar_select %p204, %s205, %s206
      %p210 = pneg %p204
      %p211 = scmp.eq.s32.totalorder %s17, 1
      %p212 = por %p210, %p211
      %p213 = scmp.ne.s32.totalorder %s205, %s208
      %p214 = scmp.eq.s32.totalorder %s17, 0
      %p215 = por %p213, %p214
      %p216 = scmp.ne.s32.totalorder %s205, %s208
      %p217 = scmp.eq.s32.totalorder %s22, 1
      %p218 = por %p216, %p217
      %p219 = scmp.ne.s32.totalorder %s208, %s209
      %p220 = scmp.eq.s32.totalorder %s22, 0
      %p221 = por %p219, %p220
      %p222 = scmp.ne.s32.totalorder %s208, %s209
      %p223 = scmp.eq.s32.totalorder %s23, 1
      %p224 = por %p222, %p223
      %p226 = scmp.ne.s32.totalorder %s209, %s225
      %p227 = scmp.eq.s32.totalorder %s23, 0
      %p228 = por %p226, %p227
      %p229 = scmp.le.s32.totalorder 1, %s17
      %p230 = scmp.lt.s32.totalorder %s17, 3
      %p231 = pnand %p229, %p230
      %p232 = pneg %p231
      // Predicated region
      $region9: #{tpu_custom_call.1} parent=5 // pred_check
        _
      $region10: #{tpu_custom_call.1} parent=5 // pred_check_branch
        %234 = sbr.rel (%p231) target = $region12
      $region11: #{tpu_custom_call.1} parent=5 // pred_region
        %s235 = ssub.s32 %s17, 1
        // Predicated region
        $region13: #{tpu_custom_call.1} parent=11 // pred_check
          %p236 = pneg %p90
        $region14: #{tpu_custom_call.1} parent=11 // pred_check_branch
          %238 = sbr.rel (%p236) target = $region16
        $region15: #{tpu_custom_call.1} parent=11 // pred_region
          _
        $region16: #{tpu_custom_call.1} parent=11 // pred_fallthru
          _
        // Predicated region
        $region17: #{tpu_custom_call.1} parent=11 // pred_check
          %p239 = pneg %p111
        $region18: #{tpu_custom_call.1} parent=11 // pred_check_branch
          %241 = sbr.rel (%p239) target = $region20
        $region19: #{tpu_custom_call.1} parent=11 // pred_region
          _
        $region20: #{tpu_custom_call.1} parent=11 // pred_fallthru
          _
        // Predicated region
        $region21: #{tpu_custom_call.1} parent=11 // pred_check
          %p242 = pneg %p132
        $region22: #{tpu_custom_call.1} parent=11 // pred_check_branch
          %244 = sbr.rel (%p242) target = $region24
        $region23: #{tpu_custom_call.1} parent=11 // pred_region
          _
        $region24: #{tpu_custom_call.1} parent=11 // pred_fallthru
          _
        // Predicated region
        $region25: #{tpu_custom_call.1} parent=11 // pred_check
          %p245 = pneg %p153
        $region26: #{tpu_custom_call.1} parent=11 // pred_check_branch
          %247 = sbr.rel (%p245) target = $region28
        $region27: #{tpu_custom_call.1} parent=11 // pred_region
          _
        $region28: #{tpu_custom_call.1} parent=11 // pred_fallthru
          _
        // Predicated region
        $region29: #{tpu_custom_call.1} parent=11 // pred_check
          %p248 = pneg %p174
        $region30: #{tpu_custom_call.1} parent=11 // pred_check_branch
          %250 = sbr.rel (%p248) target = $region32
        $region31: #{tpu_custom_call.1} parent=11 // pred_region
          _
        $region32: #{tpu_custom_call.1} parent=11 // pred_fallthru
          _
        // Predicated region
        $region33: #{tpu_custom_call.1} parent=11 // pred_check
          %p251 = pneg %p195
        $region34: #{tpu_custom_call.1} parent=11 // pred_check_branch
          %253 = sbr.rel (%p251) target = $region36
        $region35: #{tpu_custom_call.1} parent=11 // pred_region
          _
        $region36: #{tpu_custom_call.1} parent=11 // pred_fallthru
          _
      $region12: #{tpu_custom_call.1} parent=5 // pred_fallthru
        _
      %p254 = scmp.lt.s32.totalorder %s17, 2
      // Predicated region
      $region37: #{tpu_custom_call.1} parent=5 // pred_check
        %p255 = pneg %p254
      $region38: #{tpu_custom_call.1} parent=5 // pred_check_branch
        %257 = sbr.rel (%p255) target = $region40
      $region39: #{tpu_custom_call.1} parent=5 // pred_region
        // Predicated region
        $region41: #{tpu_custom_call.1} parent=39 // pred_check
          %p258 = pneg %p37
        $region42: #{tpu_custom_call.1} parent=39 // pred_check_branch
          %260 = sbr.rel (%p258) target = $region44
        $region43: #{tpu_custom_call.1} parent=39 // pred_region
          %p261 = scmp.lt.s32.totalorder %s17, 1
          %s262 = scalar_select %p261, %s17, 1
          %s263 = smul.addr %s262, 3
          %s264 = smul.addr %s263, 4
          %s265 = scalar_lea.vmem %s0, %s264
        $region44: #{tpu_custom_call.1} parent=39 // pred_fallthru
          _
        // Predicated region
        $region45: #{tpu_custom_call.1} parent=39 // pred_check
          %p266 = pneg %p63
        $region46: #{tpu_custom_call.1} parent=39 // pred_check_branch
          %268 = sbr.rel (%p266) target = $region48
        $region47: #{tpu_custom_call.1} parent=39 // pred_region
          %p269 = scmp.lt.s32.totalorder %s17, 1
          %s270 = scalar_select %p269, %s17, 1
          %s271 = smul.addr %s270, 2
          %s272 = smul.addr %s271, 8
          %s273 = scalar_lea.vmem %s1, %s272
        $region48: #{tpu_custom_call.1} parent=39 // pred_fallthru
          _
      $region40: #{tpu_custom_call.1} parent=5 // pred_fallthru
        _
      %p274 = scmp.le.s32.totalorder 1, %s17
      %p275 = scmp.lt.s32.totalorder %s17, 3
      %p276 = pnand %p274, %p275
      %p277 = pneg %p276
      // Predicated region
      $region49: #{tpu_custom_call.1} parent=5 // pred_check
        _
      $region50: #{tpu_custom_call.1} parent=5 // pred_check_branch
        %279 = sbr.rel (%p276) target = $region52
      $region51: #{tpu_custom_call.1} parent=5 // pred_region
        %s280 = ssub.s32 %s17, 1
        %p281 = scmp.lt.s32.totalorder %s22, 1
        %s282 = scalar_select %p281, %s22, 1
        %s283 = smul.addr %s282, 3
        %s284 = smul.addr %s283, 4
        %s285 = scalar_lea.vmem %s0, %s284
        %p286 = pneg %p43
        %p287 = pneg %p40
        %p288 = scmp.lt.s32.totalorder %s22, 1
        %s289 = scalar_select %p288, %s22, 1
        %s290 = smul.addr %s289, 2
        %s291 = smul.addr %s290, 8
        %s292 = scalar_lea.vmem %s1, %s291
        %p293 = pneg %p69
        %p294 = pneg %p66
        %p295 = pneg %p90
        %p296 = pneg %p87
        %p297 = pneg %p111
        %p298 = pneg %p108
        %p299 = pneg %p132
        %p300 = pneg %p129
        %p301 = pneg %p153
        %p302 = pneg %p150
        %p303 = pneg %p174
        %p304 = pneg %p171
        %p305 = pneg %p195
        %p306 = pneg %p192
        %p307 = pneg %p221
        %p308 = pneg %p218
        %s309 = sand.u32 %s208, 1
        %s310 = scalar_lea.sflag [#allocation4], %s309
        %s311 = sand.u32 %s208, 1
        %s312 = smul.addr %s311, 16
        %s313 = scalar_lea.vmem [#allocation3], %s312
        %p314 = scmp.lt.s32.totalorder %s22, 1
        %s315 = scalar_select %p314, %s22, 1
        %s316 = smul.addr %s315, 3
        %s317 = smul.addr %s316, 4
        %s318 = scalar_lea.vmem %s0, %s317
        %p319 = scmp.lt.s32.totalorder %s22, 1
        %s320 = scalar_select %p319, %s22, 1
        %s321 = smul.addr %s320, 2
        %s322 = smul.addr %s321, 8
        %s323 = scalar_lea.vmem %s1, %s322
        %v325 = vld [vmem:[%s323] sm:$0xff]
        %v326 = vld [vmem:[%s323 + $0x8] sm:$0xff]
        %vm327 = vcmask 253952
        %vm328 = vsmask.f32 256
        %vm329 = vmand %vm327, %vm328
        %v330 = vld [vmem:[#allocation2] sm:$0x1]
        %v331 = vsel %vm329, 0, %v330
        %332 = vst [vmem:[#allocation2] sm:$0x1] %v331
        %vm333 = vsmask.f32 7938
        %vm334 = vmand %vm327, %vm333
        %v335 = vld [vmem:[#allocation2 + $0x8] sm:$0x1]
        %v336 = vsel %vm334, 0, %v335
        %337 = vst [vmem:[#allocation2 + $0x8] sm:$0x1] %v336
        %v338 = vld [vmem:[%s318] sm:$0xf]
        %v339 = vld [vmem:[%s318 + $0x4] sm:$0xf]
        %v340 = vld [vmem:[%s318 + $0x8] sm:$0x1]
        %v341 = vld [vmem:[%s2] sm:$0xf]
        %v342 = vld [vmem:[%s2 + $0x4] sm:$0xf]
        %v343 = vld [vmem:[%s2 + $0x8] sm:$0xf]
        %v344 = vld [vmem:[%s2 + $0xc] sm:$0xf]
        %v345 = vld [vmem:[%s2 + $0x10] sm:$0xf]
        %v346 = vld [vmem:[%s2 + $0x14] sm:$0xf]
        %v347 = vld [vmem:[%s2 + $0x18] sm:$0xf]
        %v348 = vld [vmem:[%s2 + $0x1c] sm:$0xf]
        %v352 = vunpack.c.l.b16 %v338
        %v353 = vunpack.c.l.b16 %v339
        %v354 = vunpack.c.l.b16 %v340
        %v355 = vpack.c.b16 %v353, %v352
        %v356 = vpack.c.b16 %v354, %v354
        %vm357 = vsmask.f32 7424
        %v359 = vshrl.u32 %v355, 16
        %v361 = vshll.u32 %v355, 16
        %v363 = vrot.slane %v361, 1
        %v364 = vor.u32 %v359, %v363
        %v366 = vshll.u32 %v356, 16
        %v368 = vrot.slane %v366, 1
        %v369 = vsel %vm357, %v364, %v368
        %v374 = vunpack.c.l.b16 %v345
        %v375 = vunpack.c.l.b16 %v346
        %v376 = vunpack.c.l.b16 %v347
        %v377 = vunpack.c.l.b16 %v348
        %v378 = vpack.c.b16 %v375, %v374
        %v379 = vpack.c.b16 %v377, %v376
        %vm382 = vcmask 261120
        %v384 = vsel %vm382, %v369, 0
        %386 = vmatprep.subr.bf16.mxu0 0
        %387 = vmatpush1.bf16.msra.mxu0 %v378
        %388 = vmatprep.subr.bf16.mxu0 0
        %389 = vmatpush1.bf16.msra.mxu0 %v379
        %390 = vmatprep.subr.bf16.mxu0 0
        %391 = vmatpush1.bf16.msra.mxu0 0
        %392 = vmatprep.subr.bf16.mxu0 0
        %393 = vmatpush1.bf16.msra.mxu0 0
        %394 = vmatprep.subr.bf16.mxu0 0
        %395 = vmatpush1.bf16.msra.mxu0 0
        %396 = vmatprep.subr.bf16.mxu0 0
        %397 = vmatpush1.bf16.msra.mxu0 0
        %398 = vmatprep.subr.bf16.mxu0 0
        %399 = vmatpush1.bf16.msra.mxu0 0
        %400 = vmatprep.subr.bf16.mxu0 0
        %401 = vmatpush1.bf16.msra.mxu0 0
        %402 = vmatprep.subr.bf16.mxu0 0
        %403 = vmatpush1.bf16.msra.mxu0 0
        %404 = vmatprep.subr.bf16.mxu0 0
        %405 = vmatpush1.bf16.msra.mxu0 0
        %406 = vmatprep.subr.bf16.mxu0 0
        %407 = vmatpush1.bf16.msra.mxu0 0
        %408 = vmatprep.subr.bf16.mxu0 0
        %409 = vmatpush1.bf16.msra.mxu0 0
        %410 = vmatprep.subr.bf16.mxu0 0
        %411 = vmatpush1.bf16.msra.mxu0 0
        %412 = vmatprep.subr.bf16.mxu0 0
        %413 = vmatpush1.bf16.msra.mxu0 0
        %414 = vmatprep.subr.bf16.mxu0 0
        %415 = vmatpush1.bf16.msra.mxu0 0
        %416 = vmatprep.subr.bf16.mxu0 0
        %417 = vmatpush1.bf16.msra.mxu0 0
        %418 = vmatprep.mubr.bf16.mxu0 0
        %419 = vmatmul.mubr.bf16.gmra.mrb[0].mxu0 %v384
        %v420 = vpop.f32.mrb[0].mxu0
        %v421 = vadd.f32 0.0, %v420
        %v422 = vpop.f32.mrb[0].mxu0
        %v423 = vpop.f32.mrb[0].mxu0
        %v424 = vadd.f32 0.0, %v423
        %v425 = vpop.f32.mrb[0].mxu0
        %426 = vdwg.mxu0
        %v431 = vunpack.c.l.b16 %v341
        %v432 = vunpack.c.l.b16 %v342
        %v433 = vunpack.c.l.b16 %v343
        %v434 = vunpack.c.l.b16 %v344
        %v435 = vpack.c.b16 %v432, %v431
        %v436 = vpack.c.b16 %v434, %v433
        %v439 = vsel %vm382, %v355, 0
        %441 = vmatprep.subr.bf16.mxu0 0
        %442 = vmatpush1.bf16.msra.mxu0 %v435
        %443 = vmatprep.subr.bf16.mxu0 0
        %444 = vmatpush1.bf16.msra.mxu0 %v436
        %445 = vmatprep.subr.bf16.mxu0 0
        %446 = vmatpush1.bf16.msra.mxu0 0
        %447 = vmatprep.subr.bf16.mxu0 0
        %448 = vmatpush1.bf16.msra.mxu0 0
        %449 = vmatprep.subr.bf16.mxu0 0
        %450 = vmatpush1.bf16.msra.mxu0 0
        %451 = vmatprep.subr.bf16.mxu0 0
        %452 = vmatpush1.bf16.msra.mxu0 0
        %453 = vmatprep.subr.bf16.mxu0 0
        %454 = vmatpush1.bf16.msra.mxu0 0
        %455 = vmatprep.subr.bf16.mxu0 0
        %456 = vmatpush1.bf16.msra.mxu0 0
        %457 = vmatprep.subr.bf16.mxu0 0
        %458 = vmatpush1.bf16.msra.mxu0 0
        %459 = vmatprep.subr.bf16.mxu0 0
        %460 = vmatpush1.bf16.msra.mxu0 0
        %461 = vmatprep.subr.bf16.mxu0 0
        %462 = vmatpush1.bf16.msra.mxu0 0
        %463 = vmatprep.subr.bf16.mxu0 0
        %464 = vmatpush1.bf16.msra.mxu0 0
        %465 = vmatprep.subr.bf16.mxu0 0
        %466 = vmatpush1.bf16.msra.mxu0 0
        %467 = vmatprep.subr.bf16.mxu0 0
        %468 = vmatpush1.bf16.msra.mxu0 0
        %469 = vmatprep.subr.bf16.mxu0 0
        %470 = vmatpush1.bf16.msra.mxu0 0
        %471 = vmatprep.subr.bf16.mxu0 0
        %472 = vmatpush1.bf16.msra.mxu0 0
        %473 = vmatprep.mubr.bf16.mxu0 0
        %474 = vmatmul.mubr.bf16.gmra.mrb[0].mxu0 %v439
        %v475 = vpop.f32.mrb[0].mxu0
        %v476 = vadd.f32 %v421, %v475
        %v477 = vpop.f32.mrb[0].mxu0
        %v478 = vpop.f32.mrb[0].mxu0
        %v479 = vadd.f32 %v424, %v478
        %v480 = vpop.f32.mrb[0].mxu0
        %481 = vdwg.mxu0
        %v482 = vld [vmem:[%s2 + $0x20] sm:$0xf]
        %v483 = vld [vmem:[%s2 + $0x24] sm:$0xf]
        %v484 = vld [vmem:[%s2 + $0x28] sm:$0xf]
        %v485 = vld [vmem:[%s2 + $0x2c] sm:$0xf]
        %vm486 = vcmask 1046528
        %v487 = vrot.slane %v355, 1
        %v488 = vrot.slane %v356, 1
        %v489 = vsel %vm486, %v487, %v488
        %v494 = vunpack.c.l.b16 %v482
        %v495 = vunpack.c.l.b16 %v483
        %v496 = vunpack.c.l.b16 %v484
        %v497 = vunpack.c.l.b16 %v485
        %v498 = vpack.c.b16 %v495, %v494
        %v499 = vpack.c.b16 %v497, %v496
        %v503 = vsel %vm382, %v489, 0
        %505 = vmatprep.subr.bf16.mxu0 0
        %506 = vmatpush1.bf16.msra.mxu0 %v498
        %507 = vmatprep.subr.bf16.mxu0 0
        %508 = vmatpush1.bf16.msra.mxu0 %v499
        %509 = vmatprep.subr.bf16.mxu0 0
        %510 = vmatpush1.bf16.msra.mxu0 0
        %511 = vmatprep.subr.bf16.mxu0 0
        %512 = vmatpush1.bf16.msra.mxu0 0
        %513 = vmatprep.subr.bf16.mxu0 0
        %514 = vmatpush1.bf16.msra.mxu0 0
        %515 = vmatprep.subr.bf16.mxu0 0
        %516 = vmatpush1.bf16.msra.mxu0 0
        %517 = vmatprep.subr.bf16.mxu0 0
        %518 = vmatpush1.bf16.msra.mxu0 0
        %519 = vmatprep.subr.bf16.mxu0 0
        %520 = vmatpush1.bf16.msra.mxu0 0
        %521 = vmatprep.subr.bf16.mxu0 0
        %522 = vmatpush1.bf16.msra.mxu0 0
        %523 = vmatprep.subr.bf16.mxu0 0
        %524 = vmatpush1.bf16.msra.mxu0 0
        %525 = vmatprep.subr.bf16.mxu0 0
        %526 = vmatpush1.bf16.msra.mxu0 0
        %527 = vmatprep.subr.bf16.mxu0 0
        %528 = vmatpush1.bf16.msra.mxu0 0
        %529 = vmatprep.subr.bf16.mxu0 0
        %530 = vmatpush1.bf16.msra.mxu0 0
        %531 = vmatprep.subr.bf16.mxu0 0
        %532 = vmatpush1.bf16.msra.mxu0 0
        %533 = vmatprep.subr.bf16.mxu0 0
        %534 = vmatpush1.bf16.msra.mxu0 0
        %535 = vmatprep.subr.bf16.mxu0 0
        %536 = vmatpush1.bf16.msra.mxu0 0
        %537 = vmatprep.mubr.bf16.mxu0 0
        %538 = vmatmul.mubr.bf16.gmra.mrb[0].mxu0 %v503
        %v539 = vpop.f32.mrb[0].mxu0
        %v540 = vadd.f32 0.0, %v539
        %v541 = vpop.f32.mrb[0].mxu0
        %v542 = vpop.f32.mrb[0].mxu0
        %v543 = vadd.f32 0.0, %v542
        %v544 = vpop.f32.mrb[0].mxu0
        %545 = vdwg.mxu0
        %v546 = vadd.f32 %v476, %v540
        %v547 = vadd.f32 %v479, %v543
        %v548 = vld [vmem:[%s3] sm:$0x1]
        %v550 = vlaneseq
        %v551 = vshrl.u32 %v550, 7
        %v552 = vsub.s32 0, %v551
        %v553 = vrot.slane %v548, %v552
        %v555 = vadd.f32 %v546, %v553
        %v556 = vadd.f32 %v547, %v553
        %558 = vset.pattern.permute.xlu0 0
        %559 = vperm.xlu0 %558, %v325
        %v560 = vpop.permute.xlu0 %559
        %563 = vset.pattern.permute.xlu0 0
        %564 = vperm.xlu0 %563, %v326
        %v565 = vpop.permute.xlu0 %564
        %v567 = vmul.f32 %v555, %v560
        %v568 = vmul.f32 %v556, %v565
        %v569 = vmax.f32 %v567, 0.0
        %v570 = vmax.f32 %v568, 0.0
        %v571 = vpack.c.bf16 %v570, %v569
        %v573 = vunpack.c.l.b16 %v571
        %v574 = vunpack.c.h.b16 %v571
        %v575 = vpack.c.b16 %v573, %v573
        %v576 = vpack.c.b16 %v574, %v574
        %vm577 = vsmask.f32 4368
        %vm578 = vmor %vm328, %vm577
        %v580 = vshrl.u32 %v575, 16
        %v582 = vrot.slane %v580, 7
        %v583 = vshll.u32 %v575, 16
        %v585 = vor.u32 %v582, %v583
        %v586 = vrot.slane %v582, 4
        %v588 = vshrl.u32 %v576, 16
        %v590 = vrot.slane %v588, 7
        %v591 = vshll.u32 %v576, 16
        %v593 = vor.u32 %v590, %v591
        %v594 = vsel %vm578, %v586, %v593
        %v595 = vrot.slane %v590, 4
        %vm599 = vcmask 257024
        %vm600 = vmand %vm599, %vm333
        %v601 = vld [vmem:[#allocation2] sm:$0xf]
        %v602 = vsel %vm600, %v585, %v601
        %603 = vst [vmem:[#allocation2] sm:$0xf] %v602
        %vm604 = vcmask 257024
        %605 = vst.msk [vmem:[#allocation2 + $0x4] sm:$0xf] %vm604, %v594
        %v606 = vld [vmem:[#allocation2 + $0x8] sm:$0x1]
        %v607 = vsel %vm329, %v595, %v606
        %608 = vst [vmem:[#allocation2 + $0x8] sm:$0x1] %v607
        %v609 = vld [vmem:[#allocation2] sm:$0xf]
        %v610 = vld [vmem:[#allocation2 + $0x4] sm:$0xf]
        %v611 = vld [vmem:[#allocation2 + $0x8] sm:$0x1]
        %v612 = vld [vmem:[%s4] sm:$0xf]
        %v613 = vld [vmem:[%s4 + $0x4] sm:$0xf]
        %v614 = vld [vmem:[%s4 + $0x8] sm:$0xf]
        %v615 = vld [vmem:[%s4 + $0xc] sm:$0xf]
        %v616 = vld [vmem:[%s4 + $0x10] sm:$0xf]
        %v617 = vld [vmem:[%s4 + $0x14] sm:$0xf]
        %v618 = vld [vmem:[%s4 + $0x18] sm:$0xf]
        %v619 = vld [vmem:[%s4 + $0x1c] sm:$0xf]
        %v623 = vunpack.c.l.b16 %v609
        %v624 = vunpack.c.l.b16 %v610
        %v625 = vunpack.c.l.b16 %v611
        %v626 = vpack.c.b16 %v624, %v623
        %v627 = vpack.c.b16 %v625, %v625
        %v629 = vshrl.u32 %v626, 16
        %v631 = vshll.u32 %v626, 16
        %v633 = vrot.slane %v631, 1
        %v634 = vor.u32 %v629, %v633
        %v636 = vshll.u32 %v627, 16
        %v638 = vrot.slane %v636, 1
        %v639 = vsel %vm357, %v634, %v638
        %v644 = vunpack.c.l.b16 %v616
        %v645 = vunpack.c.l.b16 %v617
        %v646 = vunpack.c.l.b16 %v618
        %v647 = vunpack.c.l.b16 %v619
        %v648 = vpack.c.b16 %v645, %v644
        %v649 = vpack.c.b16 %v647, %v646
        %v653 = vsel %vm382, %v639, 0
        %655 = vmatprep.subr.bf16.mxu0 0
        %656 = vmatpush1.bf16.msra.mxu0 %v648
        %657 = vmatprep.subr.bf16.mxu0 0
        %658 = vmatpush1.bf16.msra.mxu0 %v649
        %659 = vmatprep.subr.bf16.mxu0 0
        %660 = vmatpush1.bf16.msra.mxu0 0
        %661 = vmatprep.subr.bf16.mxu0 0
        %662 = vmatpush1.bf16.msra.mxu0 0
        %663 = vmatprep.subr.bf16.mxu0 0
        %664 = vmatpush1.bf16.msra.mxu0 0
        %665 = vmatprep.subr.bf16.mxu0 0
        %666 = vmatpush1.bf16.msra.mxu0 0
        %667 = vmatprep.subr.bf16.mxu0 0
        %668 = vmatpush1.bf16.msra.mxu0 0
        %669 = vmatprep.subr.bf16.mxu0 0
        %670 = vmatpush1.bf16.msra.mxu0 0
        %671 = vmatprep.subr.bf16.mxu0 0
        %672 = vmatpush1.bf16.msra.mxu0 0
        %673 = vmatprep.subr.bf16.mxu0 0
        %674 = vmatpush1.bf16.msra.mxu0 0
        %675 = vmatprep.subr.bf16.mxu0 0
        %676 = vmatpush1.bf16.msra.mxu0 0
        %677 = vmatprep.subr.bf16.mxu0 0
        %678 = vmatpush1.bf16.msra.mxu0 0
        %679 = vmatprep.subr.bf16.mxu0 0
        %680 = vmatpush1.bf16.msra.mxu0 0
        %681 = vmatprep.subr.bf16.mxu0 0
        %682 = vmatpush1.bf16.msra.mxu0 0
        %683 = vmatprep.subr.bf16.mxu0 0
        %684 = vmatpush1.bf16.msra.mxu0 0
        %685 = vmatprep.subr.bf16.mxu0 0
        %686 = vmatpush1.bf16.msra.mxu0 0
        %687 = vmatprep.mubr.bf16.mxu0 0
        %688 = vmatmul.mubr.bf16.gmra.mrb[0].mxu0 %v653
        %v689 = vpop.f32.mrb[0].mxu0
        %v690 = vadd.f32 0.0, %v689
        %v691 = vpop.f32.mrb[0].mxu0
        %v692 = vpop.f32.mrb[0].mxu0
        %v693 = vadd.f32 0.0, %v692
        %v694 = vpop.f32.mrb[0].mxu0
        %695 = vdwg.mxu0
        %v700 = vunpack.c.l.b16 %v612
        %v701 = vunpack.c.l.b16 %v613
        %v702 = vunpack.c.l.b16 %v614
        %v703 = vunpack.c.l.b16 %v615
        %v704 = vpack.c.b16 %v701, %v700
        %v705 = vpack.c.b16 %v703, %v702
        %v708 = vsel %vm382, %v626, 0
        %710 = vmatprep.subr.bf16.mxu0 0
        %711 = vmatpush1.bf16.msra.mxu0 %v704
        %712 = vmatprep.subr.bf16.mxu0 0
        %713 = vmatpush1.bf16.msra.mxu0 %v705
        %714 = vmatprep.subr.bf16.mxu0 0
        %715 = vmatpush1.bf16.msra.mxu0 0
        %716 = vmatprep.subr.bf16.mxu0 0
        %717 = vmatpush1.bf16.msra.mxu0 0
        %718 = vmatprep.subr.bf16.mxu0 0
        %719 = vmatpush1.bf16.msra.mxu0 0
        %720 = vmatprep.subr.bf16.mxu0 0
        %721 = vmatpush1.bf16.msra.mxu0 0
        %722 = vmatprep.subr.bf16.mxu0 0
        %723 = vmatpush1.bf16.msra.mxu0 0
        %724 = vmatprep.subr.bf16.mxu0 0
        %725 = vmatpush1.bf16.msra.mxu0 0
        %726 = vmatprep.subr.bf16.mxu0 0
        %727 = vmatpush1.bf16.msra.mxu0 0
        %728 = vmatprep.subr.bf16.mxu0 0
        %729 = vmatpush1.bf16.msra.mxu0 0
        %730 = vmatprep.subr.bf16.mxu0 0
        %731 = vmatpush1.bf16.msra.mxu0 0
        %732 = vmatprep.subr.bf16.mxu0 0
        %733 = vmatpush1.bf16.msra.mxu0 0
        %734 = vmatprep.subr.bf16.mxu0 0
        %735 = vmatpush1.bf16.msra.mxu0 0
        %736 = vmatprep.subr.bf16.mxu0 0
        %737 = vmatpush1.bf16.msra.mxu0 0
        %738 = vmatprep.subr.bf16.mxu0 0
        %739 = vmatpush1.bf16.msra.mxu0 0
        %740 = vmatprep.subr.bf16.mxu0 0
        %741 = vmatpush1.bf16.msra.mxu0 0
        %742 = vmatprep.mubr.bf16.mxu0 0
        %743 = vmatmul.mubr.bf16.gmra.mrb[0].mxu0 %v708
        %v744 = vpop.f32.mrb[0].mxu0
        %v745 = vadd.f32 %v690, %v744
        %v746 = vpop.f32.mrb[0].mxu0
        %v747 = vpop.f32.mrb[0].mxu0
        %v748 = vadd.f32 %v693, %v747
        %v749 = vpop.f32.mrb[0].mxu0
        %750 = vdwg.mxu0
        %v751 = vld [vmem:[%s4 + $0x20] sm:$0xf]
        %v752 = vld [vmem:[%s4 + $0x24] sm:$0xf]
        %v753 = vld [vmem:[%s4 + $0x28] sm:$0xf]
        %v754 = vld [vmem:[%s4 + $0x2c] sm:$0xf]
        %v755 = vrot.slane %v626, 1
        %v756 = vrot.slane %v627, 1
        %v757 = vsel %vm486, %v755, %v756
        %v762 = vunpack.c.l.b16 %v751
        %v763 = vunpack.c.l.b16 %v752
        %v764 = vunpack.c.l.b16 %v753
        %v765 = vunpack.c.l.b16 %v754
        %v766 = vpack.c.b16 %v763, %v762
        %v767 = vpack.c.b16 %v765, %v764
        %v771 = vsel %vm382, %v757, 0
        %773 = vmatprep.subr.bf16.mxu0 0
        %774 = vmatpush1.bf16.msra.mxu0 %v766
        %775 = vmatprep.subr.bf16.mxu0 0
        %776 = vmatpush1.bf16.msra.mxu0 %v767
        %777 = vmatprep.subr.bf16.mxu0 0
        %778 = vmatpush1.bf16.msra.mxu0 0
        %779 = vmatprep.subr.bf16.mxu0 0
        %780 = vmatpush1.bf16.msra.mxu0 0
        %781 = vmatprep.subr.bf16.mxu0 0
        %782 = vmatpush1.bf16.msra.mxu0 0
        %783 = vmatprep.subr.bf16.mxu0 0
        %784 = vmatpush1.bf16.msra.mxu0 0
        %785 = vmatprep.subr.bf16.mxu0 0
        %786 = vmatpush1.bf16.msra.mxu0 0
        %787 = vmatprep.subr.bf16.mxu0 0
        %788 = vmatpush1.bf16.msra.mxu0 0
        %789 = vmatprep.subr.bf16.mxu0 0
        %790 = vmatpush1.bf16.msra.mxu0 0
        %791 = vmatprep.subr.bf16.mxu0 0
        %792 = vmatpush1.bf16.msra.mxu0 0
        %793 = vmatprep.subr.bf16.mxu0 0
        %794 = vmatpush1.bf16.msra.mxu0 0
        %795 = vmatprep.subr.bf16.mxu0 0
        %796 = vmatpush1.bf16.msra.mxu0 0
        %797 = vmatprep.subr.bf16.mxu0 0
        %798 = vmatpush1.bf16.msra.mxu0 0
        %799 = vmatprep.subr.bf16.mxu0 0
        %800 = vmatpush1.bf16.msra.mxu0 0
        %801 = vmatprep.subr.bf16.mxu0 0
        %802 = vmatpush1.bf16.msra.mxu0 0
        %803 = vmatprep.subr.bf16.mxu0 0
        %804 = vmatpush1.bf16.msra.mxu0 0
        %805 = vmatprep.mubr.bf16.mxu0 0
        %806 = vmatmul.mubr.bf16.gmra.mrb[0].mxu0 %v771
        %v807 = vpop.f32.mrb[0].mxu0
        %v808 = vadd.f32 0.0, %v807
        %v809 = vpop.f32.mrb[0].mxu0
        %v810 = vpop.f32.mrb[0].mxu0
        %v811 = vadd.f32 0.0, %v810
        %v812 = vpop.f32.mrb[0].mxu0
        %813 = vdwg.mxu0
        %v814 = vadd.f32 %v745, %v808
        %v815 = vadd.f32 %v748, %v811
        %v816 = vld [vmem:[%s5] sm:$0x1]
        %v818 = vlaneseq
        %v819 = vshrl.u32 %v818, 7
        %v820 = vsub.s32 0, %v819
        %v821 = vrot.slane %v816, %v820
        %v823 = vadd.f32 %v814, %v821
        %v824 = vadd.f32 %v815, %v821
        %v825 = vmul.f32 %v823, %v560
        %v826 = vmul.f32 %v824, %v565
        %v827 = vmax.f32 %v825, 0.0
        %v828 = vmax.f32 %v826, 0.0
        %v829 = vpack.c.bf16 %v828, %v827
        %v831 = vunpack.c.l.b16 %v829
        %v832 = vunpack.c.h.b16 %v829
        %v833 = vpack.c.b16 %v831, %v831
        %v834 = vpack.c.b16 %v832, %v832
        %v836 = vshrl.u32 %v833, 16
        %v838 = vrot.slane %v836, 7
        %v839 = vshll.u32 %v833, 16
        %v841 = vor.u32 %v838, %v839
        %v842 = vrot.slane %v838, 4
        %v844 = vshrl.u32 %v834, 16
        %v846 = vrot.slane %v844, 7
        %v847 = vshll.u32 %v834, 16
        %v849 = vor.u32 %v846, %v847
        %v850 = vsel %vm578, %v842, %v849
        %v851 = vrot.slane %v846, 4
        %v855 = vsel %vm600, %v841, %v609
        %856 = vst [vmem:[#allocation2] sm:$0xf] %v855
        %857 = vst.msk [vmem:[#allocation2 + $0x4] sm:$0xf] %vm604, %v850
        %v858 = vld [vmem:[#allocation2 + $0x8] sm:$0x1]
        %v859 = vsel %vm329, %v851, %v858
        %860 = vst [vmem:[#allocation2 + $0x8] sm:$0x1] %v859
        %v861 = vld [vmem:[#allocation2] sm:$0xf]
        %v862 = vld [vmem:[#allocation2 + $0x4] sm:$0xf]
        %v863 = vld [vmem:[#allocation2 + $0x8] sm:$0x1]
        %v864 = vld [vmem:[%s6] sm:$0xf]
        %v865 = vld [vmem:[%s6 + $0x4] sm:$0xf]
        %v866 = vld [vmem:[%s6 + $0x8] sm:$0xf]
        %v867 = vld [vmem:[%s6 + $0xc] sm:$0xf]
        %v868 = vld [vmem:[%s6 + $0x10] sm:$0xf]
        %v869 = vld [vmem:[%s6 + $0x14] sm:$0xf]
        %v870 = vld [vmem:[%s6 + $0x18] sm:$0xf]
        %v871 = vld [vmem:[%s6 + $0x1c] sm:$0xf]
        %v875 = vunpack.c.l.b16 %v861
        %v876 = vunpack.c.l.b16 %v862
        %v877 = vunpack.c.l.b16 %v863
        %v878 = vpack.c.b16 %v876, %v875
        %v879 = vpack.c.b16 %v877, %v877
        %v881 = vshrl.u32 %v878, 16
        %v883 = vshll.u32 %v878, 16
        %v885 = vrot.slane %v883, 1
        %v886 = vor.u32 %v881, %v885
        %v888 = vshll.u32 %v879, 16
        %v890 = vrot.slane %v888, 1
        %v891 = vsel %vm357, %v886, %v890
        %v896 = vunpack.c.l.b16 %v868
        %v897 = vunpack.c.l.b16 %v869
        %v898 = vunpack.c.l.b16 %v870
        %v899 = vunpack.c.l.b16 %v871
        %v900 = vpack.c.b16 %v897, %v896
        %v901 = vpack.c.b16 %v899, %v898
        %v905 = vsel %vm382, %v891, 0
        %907 = vmatprep.subr.bf16.mxu0 0
        %908 = vmatpush1.bf16.msra.mxu0 %v900
        %909 = vmatprep.subr.bf16.mxu0 0
        %910 = vmatpush1.bf16.msra.mxu0 %v901
        %911 = vmatprep.subr.bf16.mxu0 0
        %912 = vmatpush1.bf16.msra.mxu0 0
        %913 = vmatprep.subr.bf16.mxu0 0
        %914 = vmatpush1.bf16.msra.mxu0 0
        %915 = vmatprep.subr.bf16.mxu0 0
        %916 = vmatpush1.bf16.msra.mxu0 0
        %917 = vmatprep.subr.bf16.mxu0 0
        %918 = vmatpush1.bf16.msra.mxu0 0
        %919 = vmatprep.subr.bf16.mxu0 0
        %920 = vmatpush1.bf16.msra.mxu0 0
        %921 = vmatprep.subr.bf16.mxu0 0
        %922 = vmatpush1.bf16.msra.mxu0 0
        %923 = vmatprep.subr.bf16.mxu0 0
        %924 = vmatpush1.bf16.msra.mxu0 0
        %925 = vmatprep.subr.bf16.mxu0 0
        %926 = vmatpush1.bf16.msra.mxu0 0
        %927 = vmatprep.subr.bf16.mxu0 0
        %928 = vmatpush1.bf16.msra.mxu0 0
        %929 = vmatprep.subr.bf16.mxu0 0
        %930 = vmatpush1.bf16.msra.mxu0 0
        %931 = vmatprep.subr.bf16.mxu0 0
        %932 = vmatpush1.bf16.msra.mxu0 0
        %933 = vmatprep.subr.bf16.mxu0 0
        %934 = vmatpush1.bf16.msra.mxu0 0
        %935 = vmatprep.subr.bf16.mxu0 0
        %936 = vmatpush1.bf16.msra.mxu0 0
        %937 = vmatprep.subr.bf16.mxu0 0
        %938 = vmatpush1.bf16.msra.mxu0 0
        %939 = vmatprep.mubr.bf16.mxu0 0
        %940 = vmatmul.mubr.bf16.gmra.mrb[0].mxu0 %v905
        %v941 = vpop.f32.mrb[0].mxu0
        %v942 = vadd.f32 0.0, %v941
        %v943 = vpop.f32.mrb[0].mxu0
        %v944 = vpop.f32.mrb[0].mxu0
        %v945 = vadd.f32 0.0, %v944
        %v946 = vpop.f32.mrb[0].mxu0
        %947 = vdwg.mxu0
        %v952 = vunpack.c.l.b16 %v864
        %v953 = vunpack.c.l.b16 %v865
        %v954 = vunpack.c.l.b16 %v866
        %v955 = vunpack.c.l.b16 %v867
        %v956 = vpack.c.b16 %v953, %v952
        %v957 = vpack.c.b16 %v955, %v954
        %v960 = vsel %vm382, %v878, 0
        %962 = vmatprep.subr.bf16.mxu0 0
        %963 = vmatpush1.bf16.msra.mxu0 %v956
        %964 = vmatprep.subr.bf16.mxu0 0
        %965 = vmatpush1.bf16.msra.mxu0 %v957
        %966 = vmatprep.subr.bf16.mxu0 0
        %967 = vmatpush1.bf16.msra.mxu0 0
        %968 = vmatprep.subr.bf16.mxu0 0
        %969 = vmatpush1.bf16.msra.mxu0 0
        %970 = vmatprep.subr.bf16.mxu0 0
        %971 = vmatpush1.bf16.msra.mxu0 0
        %972 = vmatprep.subr.bf16.mxu0 0
        %973 = vmatpush1.bf16.msra.mxu0 0
        %974 = vmatprep.subr.bf16.mxu0 0
        %975 = vmatpush1.bf16.msra.mxu0 0
        %976 = vmatprep.subr.bf16.mxu0 0
        %977 = vmatpush1.bf16.msra.mxu0 0
        %978 = vmatprep.subr.bf16.mxu0 0
        %979 = vmatpush1.bf16.msra.mxu0 0
        %980 = vmatprep.subr.bf16.mxu0 0
        %981 = vmatpush1.bf16.msra.mxu0 0
        %982 = vmatprep.subr.bf16.mxu0 0
        %983 = vmatpush1.bf16.msra.mxu0 0
        %984 = vmatprep.subr.bf16.mxu0 0
        %985 = vmatpush1.bf16.msra.mxu0 0
        %986 = vmatprep.subr.bf16.mxu0 0
        %987 = vmatpush1.bf16.msra.mxu0 0
        %988 = vmatprep.subr.bf16.mxu0 0
        %989 = vmatpush1.bf16.msra.mxu0 0
        %990 = vmatprep.subr.bf16.mxu0 0
        %991 = vmatpush1.bf16.msra.mxu0 0
        %992 = vmatprep.subr.bf16.mxu0 0
        %993 = vmatpush1.bf16.msra.mxu0 0
        %994 = vmatprep.mubr.bf16.mxu0 0
        %995 = vmatmul.mubr.bf16.gmra.mrb[0].mxu0 %v960
        %v996 = vpop.f32.mrb[0].mxu0
        %v997 = vadd.f32 %v942, %v996
        %v998 = vpop.f32.mrb[0].mxu0
        %v999 = vpop.f32.mrb[0].mxu0
        %v1000 = vadd.f32 %v945, %v999
        %v1001 = vpop.f32.mrb[0].mxu0
        %1002 = vdwg.mxu0
        %v1003 = vld [vmem:[%s6 + $0x20] sm:$0xf]
        %v1004 = vld [vmem:[%s6 + $0x24] sm:$0xf]
        %v1005 = vld [vmem:[%s6 + $0x28] sm:$0xf]
        %v1006 = vld [vmem:[%s6 + $0x2c] sm:$0xf]
        %v1007 = vrot.slane %v878, 1
        %v1008 = vrot.slane %v879, 1
        %v1009 = vsel %vm486, %v1007, %v1008
        %v1014 = vunpack.c.l.b16 %v1003
        %v1015 = vunpack.c.l.b16 %v1004
        %v1016 = vunpack.c.l.b16 %v1005
        %v1017 = vunpack.c.l.b16 %v1006
        %v1018 = vpack.c.b16 %v1015, %v1014
        %v1019 = vpack.c.b16 %v1017, %v1016
        %v1023 = vsel %vm382, %v1009, 0
        %1025 = vmatprep.subr.bf16.mxu0 0
        %1026 = vmatpush1.bf16.msra.mxu0 %v1018
        %1027 = vmatprep.subr.bf16.mxu0 0
        %1028 = vmatpush1.bf16.msra.mxu0 %v1019
        %1029 = vmatprep.subr.bf16.mxu0 0
        %1030 = vmatpush1.bf16.msra.mxu0 0
        %1031 = vmatprep.subr.bf16.mxu0 0
        %1032 = vmatpush1.bf16.msra.mxu0 0
        %1033 = vmatprep.subr.bf16.mxu0 0
        %1034 = vmatpush1.bf16.msra.mxu0 0
        %1035 = vmatprep.subr.bf16.mxu0 0
        %1036 = vmatpush1.bf16.msra.mxu0 0
        %1037 = vmatprep.subr.bf16.mxu0 0
        %1038 = vmatpush1.bf16.msra.mxu0 0
        %1039 = vmatprep.subr.bf16.mxu0 0
        %1040 = vmatpush1.bf16.msra.mxu0 0
        %1041 = vmatprep.subr.bf16.mxu0 0
        %1042 = vmatpush1.bf16.msra.mxu0 0
        %1043 = vmatprep.subr.bf16.mxu0 0
        %1044 = vmatpush1.bf16.msra.mxu0 0
        %1045 = vmatprep.subr.bf16.mxu0 0
        %1046 = vmatpush1.bf16.msra.mxu0 0
        %1047 = vmatprep.subr.bf16.mxu0 0
        %1048 = vmatpush1.bf16.msra.mxu0 0
        %1049 = vmatprep.subr.bf16.mxu0 0
        %1050 = vmatpush1.bf16.msra.mxu0 0
        %1051 = vmatprep.subr.bf16.mxu0 0
        %1052 = vmatpush1.bf16.msra.mxu0 0
        %1053 = vmatprep.subr.bf16.mxu0 0
        %1054 = vmatpush1.bf16.msra.mxu0 0
        %1055 = vmatprep.subr.bf16.mxu0 0
        %1056 = vmatpush1.bf16.msra.mxu0 0
        %1057 = vmatprep.mubr.bf16.mxu0 0
        %1058 = vmatmul.mubr.bf16.gmra.mrb[0].mxu0 %v1023
        %v1059 = vpop.f32.mrb[0].mxu0
        %v1060 = vadd.f32 0.0, %v1059
        %v1061 = vpop.f32.mrb[0].mxu0
        %v1062 = vpop.f32.mrb[0].mxu0
        %v1063 = vadd.f32 0.0, %v1062
        %v1064 = vpop.f32.mrb[0].mxu0
        %1065 = vdwg.mxu0
        %v1066 = vadd.f32 %v997, %v1060
        %v1067 = vadd.f32 %v1000, %v1063
        %v1068 = vld [vmem:[%s7] sm:$0x1]
        %v1070 = vlaneseq
        %v1071 = vshrl.u32 %v1070, 7
        %v1072 = vsub.s32 0, %v1071
        %v1073 = vrot.slane %v1068, %v1072
        %v1075 = vadd.f32 %v1066, %v1073
        %v1076 = vadd.f32 %v1067, %v1073
        %v1077 = vmul.f32 %v1075, %v560
        %v1078 = vmul.f32 %v1076, %v565
        %1079 = vst [vmem:[%s313] sm:$0xff] %v1077
        %1080 = vst [vmem:[%s313 + $0x8] sm:$0xff] %v1078
        %s1081 = sand.u32 %s208, 1
        %s1082 = scalar_lea.sflag [#allocation4], %s1081
        %s1083 = sand.u32 %s208, 1
        %s1084 = smul.addr %s1083, 16
        %s1085 = scalar_lea.vmem [#allocation3], %s1084
        // Predicated region
        $region53: #{tpu_custom_call.1} parent=51 // pred_check
          %p1086 = pneg %p218
        $region54: #{tpu_custom_call.1} parent=51 // pred_check_branch
          %1088 = sbr.rel (%p1086) target = $region56
        $region55: #{tpu_custom_call.1} parent=51 // pred_region
          %s1090 = ssub.s32 256, 256
          %1091 = vsyncadd %s1082, %s1090
          %s1092 = smul.addr %s22, 2
          %s1093 = smul.addr %s1092, 128
          %s1094 = scalar_lea.hbm %s8, %s1093
          %s1095 = sshll.u32 %s1085, 4
          %s1096 = int_to_ptr.vmem [resolvable:$true] %s1095
          %1101 = dma.vmem_to_hbm [thread:$0]  %s1096, 256, %s1094, %s1082, 128, 128, 8
        $region56: #{tpu_custom_call.1} parent=51 // pred_fallthru
          _
      $region52: #{tpu_custom_call.1} parent=5 // pred_fallthru
        _
      %p1102 = scmp.le.s32.totalorder 2, %s17
      // Predicated region
      $region57: #{tpu_custom_call.1} parent=5 // pred_check
        %p1103 = pneg %p1102
      $region58: #{tpu_custom_call.1} parent=5 // pred_check_branch
        %1105 = sbr.rel (%p1103) target = $region60
      $region59: #{tpu_custom_call.1} parent=5 // pred_region
        %s1106 = ssub.s32 %s17, 2
        // Predicated region
        $region61: #{tpu_custom_call.1} parent=59 // pred_check
          %p1107 = pneg %p224
        $region62: #{tpu_custom_call.1} parent=59 // pred_check_branch
          %1109 = sbr.rel (%p1107) target = $region64
        $region63: #{tpu_custom_call.1} parent=59 // pred_region
          %s1110 = sand.u32 %s209, 1
          %s1111 = scalar_lea.sflag [#allocation4], %s1110
          %s1112 = sand.u32 %s209, 1
          %s1113 = smul.addr %s1112, 16
          %s1114 = scalar_lea.vmem [#allocation3], %s1113
          %1115 = dma.done %s1111, 256
        $region64: #{tpu_custom_call.1} parent=59 // pred_fallthru
          _
      $region60: #{tpu_custom_call.1} parent=5 // pred_fallthru
        _
    $region6: #{tpu_custom_call.1} parent=1 // loop_footer
      %s21 = sadd.s32 1, %s17
    $region7: #{tpu_custom_call.1} parent=1 // loop_footer_branch
      %16 = sbr.rel target = $region3
    $region8: #{tpu_custom_call.1} parent=1 // loop_exit
      _
    %1116 = vsyncpa [#allocation4], 1
    %s1117 = scalar_lea.sflag [#allocation4], 1
    %1118 = vsyncpa %s1117, 1

</llo_original>
